<compile_context>
chip_gen: v6e
topology: v6e:2x2x1
jax: 0.10.0
libtpu: 0.0.40
codegen_flags: <defaults>
</compile_context>

<pallas_src>
import math

import jax
import jax.numpy as jnp
from jax.experimental import pallas as pl
from jax.experimental.pallas import tpu as pltpu


def _rbf_kernel(dist_ref, a_ref, c_ref, out_ref):
    # dist_ref: (TILE_N, 1) VMEM  -- edge distances on the sublane axis
    # a_ref, c_ref: (1, NB) VMEM  -- fused per-basis scale / offset (lane axis)
    # out_ref: (TILE_N, NB) VMEM
    z = dist_ref[...] * a_ref[...] + c_ref[...]          # fma -> (TILE_N, NB)
    out_ref[...] = jnp.exp(-(z * z)).astype(out_ref.dtype)


def _pick_tile_n(n, num_basis, out_itemsize, target_block_bytes=2 << 20):
    """Row-tile heuristic: ~2 MiB output block, multiple of 8, >=2 grid steps
    when there is enough work (keeps both v7x TensorCores fed)."""
    row_bytes = max(num_basis * out_itemsize, 1)
    tile_n = max(8, (target_block_bytes // row_bytes) // 8 * 8)
    n_rounded = ((n + 7) // 8) * 8
    tile_n = min(tile_n, n_rounded)
    # v7x megacore: ensure the parallel axis has >=2 steps if the total output
    # is big enough that splitting beats the ~0.35us per-step overhead.
    if n * row_bytes >= (512 << 10):
        half = ((pl.cdiv(n, 2) + 7) // 8) * 8
        tile_n = min(tile_n, max(half, 8))
    return max(tile_n, 8)


def gaussian_rbf_pallas(dist, mean, std, weight, bias, cutoff,
                        *, out_dtype=jnp.float32, tile_n=None):
    """Pallas implementation of GaussianRadialBasisLayer.forward.

    dist:  (N,) float32
    mean:  (1, num_basis) float32
    std:   (1, num_basis) float32
    weight, bias: (1, 1) float32
    returns (N, num_basis) `out_dtype` (f32 by default; bf16 optional for a
    downstream consumer — math stays f32 either way, only the store is cast)
    """
    n = dist.shape[0]
    num_basis = mean.shape[1]
    out_itemsize = jnp.dtype(out_dtype).itemsize

    # ---- fuse grid-invariant per-basis constants (tiny XLA ops, done once) ----
    # Reference: exp(-0.5 * ((w*d/cutoff + b - mean) / (|std|+eps))^2)
    # Fold sqrt(0.5) into the affine so the kernel body is exp(-(z*z)).
    inv_std = 1.0 / (jnp.abs(std).astype(jnp.float32) + 1e-05)          # (1, NB)
    w = weight.reshape(()).astype(jnp.float32)
    b = bias.reshape(()).astype(jnp.float32)
    sqrt_half = jnp.float32(math.sqrt(0.5))
    a = sqrt_half * (w / jnp.float32(cutoff)) * inv_std                 # (1, NB)
    c = sqrt_half * (b - mean.astype(jnp.float32)) * inv_std            # (1, NB)

    dist2d = dist.reshape(n, 1).astype(jnp.float32)

    # ---- tiling: no padding, no post-slice; Pallas masks ragged edges ----
    if tile_n is None:
        tile_n = _pick_tile_n(n, num_basis, out_itemsize)
    else:
        tile_n = max(8, ((int(tile_n) + 7) // 8) * 8)
        tile_n = min(tile_n, ((n + 7) // 8) * 8)
    grid = (pl.cdiv(n, tile_n),)

    # ---- VMEM budget: double-buffered blocks + headroom, capped at 32 MiB ----
    block_bytes = (tile_n * num_basis * out_itemsize      # output block
                   + tile_n * 4                           # dist block
                   + 2 * num_basis * 4)                   # a, c
    vmem_limit = int(min(max(4 * block_bytes, 8 << 20), 32 << 20))

    cost = pl.CostEstimate(
        flops=3 * n * num_basis,
        transcendentals=n * num_basis,
        bytes_accessed=n * num_basis * out_itemsize + n * 4 + 2 * num_basis * 4,
    )

    out = pl.pallas_call(
        _rbf_kernel,
        out_shape=jax.ShapeDtypeStruct((n, num_basis), out_dtype),
        grid=grid,
        in_specs=[
            pl.BlockSpec((tile_n, 1), lambda i: (i, 0)),
            pl.BlockSpec((1, num_basis), lambda i: (0, 0)),
            pl.BlockSpec((1, num_basis), lambda i: (0, 0)),
        ],
        out_specs=pl.BlockSpec((tile_n, num_basis), lambda i: (i, 0)),
        compiler_params=pltpu.CompilerParams(
            dimension_semantics=("parallel",),
            vmem_limit_bytes=vmem_limit),
        cost_estimate=cost,
    )(dist2d, a, c)
    return out


def gaussian_rbf_reference(dist, mean, std, weight, bias, cutoff):
    """Pure-JAX reference mirroring the PyTorch forward exactly."""
    x = dist / cutoff
    x = x[:, None]                       # unsqueeze(-1)
    x = weight * x + bias                # (N, 1) via broadcasting with (1, 1)
    x = jnp.broadcast_to(x, (dist.shape[0], mean.shape[1]))
    s = jnp.abs(std) + 1e-05
    return jnp.exp(-0.5 * ((x - mean) / s) ** 2)


def _make_params(key, num_basis):
    k_mean, k_std = jax.random.split(key)
    # Matches the module's __init__:
    #   mean ~ U(0, 1), std ~ U(1/num_basis, 1), weight = 1, bias = 0
    mean = jax.random.uniform(k_mean, (1, num_basis), jnp.float32, 0.0, 1.0)
    std = jax.random.uniform(k_std, (1, num_basis), jnp.float32,
                             1.0 / num_basis, 1.0)
    weight = jnp.ones((1, 1), jnp.float32)
    bias = jnp.zeros((1, 1), jnp.float32)
    return mean, std, weight, bias


if __name__ == "__main__":
    cutoff = 5.0
    key = jax.random.PRNGKey(0)
    k_param, k_dist, k_param2, k_dist2 = jax.random.split(key, 4)

    # --- primary check: num_basis multiple of 128, small edge count ---
    num_basis, N = 128, 16
    mean, std, weight, bias = _make_params(k_param, num_basis)
    dist = jax.random.uniform(k_dist, (N,), jnp.float32, 0.0, cutoff)

    out = gaussian_rbf_pallas(dist, mean, std, weight, bias, cutoff)
    out = jax.block_until_ready(out)
    ref = gaussian_rbf_reference(dist, mean, std, weight, bias, cutoff)
    assert out.shape == (N, num_basis)
    assert out.dtype == jnp.float32
    assert jnp.allclose(out, ref, atol=1e-5, rtol=1e-5)

    # --- ragged check: non-multiple basis count and edge count (masked edges) ---
    num_basis2, N2 = 96, 20
    mean2, std2, weight2, bias2 = _make_params(k_param2, num_basis2)
    dist2 = jax.random.uniform(k_dist2, (N2,), jnp.float32, 0.0, cutoff)

    out2 = gaussian_rbf_pallas(dist2, mean2, std2, weight2, bias2, cutoff,
                               tile_n=8)  # force multiple (ragged) grid steps
    out2 = jax.block_until_ready(out2)
    ref2 = gaussian_rbf_reference(dist2, mean2, std2, weight2, bias2, cutoff)
    assert out2.shape == (N2, num_basis2)
    assert jnp.allclose(out2, ref2, atol=1e-5, rtol=1e-5)

    # --- optional bf16-output path (downstream consumer in bf16) ---
    out3 = gaussian_rbf_pallas(dist, mean, std, weight, bias, cutoff,
                               out_dtype=jnp.bfloat16)
    out3 = jax.block_until_ready(out3)
    assert out3.dtype == jnp.bfloat16
    assert jnp.allclose(out3.astype(jnp.float32), ref, atol=2e-2, rtol=2e-2)

    print("KERNEL_OK")
</pallas_src>

<mosaic_0001>
module attributes {stable_mosaic.version = 11 : i64} {
  func.func @_rbf_kernel(%arg0: i32, %arg1: memref<16x1xf32, #tpu.memory_space<vmem>>, %arg2: memref<1x128xf32, #tpu.memory_space<vmem>>, %arg3: memref<1x128xf32, #tpu.memory_space<vmem>>, %arg4: memref<16x128xf32, #tpu.memory_space<vmem>>) attributes {dimension_semantics = [#tpu.dimension_semantics<parallel>], iteration_bounds = array<i64: 1>, scalar_prefetch = 0 : i64, scratch_operands = 0 : i64, tpu.core_type = #tpu.core_type<tc>, window_params = [{transform_indices = @transform_0, window_bounds = array<i64: 16, 1>}, {pipeline_mode = #tpu.pipeline_mode<synchronous>, transform_indices = @transform_1, window_bounds = array<i64: 1, 128>}, {pipeline_mode = #tpu.pipeline_mode<synchronous>, transform_indices = @transform_2, window_bounds = array<i64: 1, 128>}, {transform_indices = @transform_3, window_bounds = array<i64: 16, 128>}]} {
    %c0 = arith.constant 0 : index
    %c0_0 = arith.constant 0 : index
    %0 = vector.load %arg1[%c0, %c0_0] : memref<16x1xf32, #tpu.memory_space<vmem>>, vector<16x1xf32>
    %c0_1 = arith.constant 0 : index
    %c0_2 = arith.constant 0 : index
    %1 = vector.load %arg2[%c0_1, %c0_2] : memref<1x128xf32, #tpu.memory_space<vmem>>, vector<1x128xf32>
    %2 = vector.broadcast %0 : vector<16x1xf32> to vector<16x128xf32>
    %3 = vector.broadcast %1 : vector<1x128xf32> to vector<16x128xf32>
    %4 = arith.mulf %2, %3 : vector<16x128xf32>
    %c0_3 = arith.constant 0 : index
    %c0_4 = arith.constant 0 : index
    %5 = vector.load %arg3[%c0_3, %c0_4] : memref<1x128xf32, #tpu.memory_space<vmem>>, vector<1x128xf32>
    %6 = vector.broadcast %5 : vector<1x128xf32> to vector<16x128xf32>
    %7 = arith.addf %4, %6 : vector<16x128xf32>
    %8 = arith.mulf %7, %7 : vector<16x128xf32>
    %cst = arith.constant 0.000000e+00 : f32
    %9 = vector.broadcast %cst : f32 to vector<16x128xf32>
    %10 = arith.subf %9, %8 : vector<16x128xf32>
    %11 = math.exp %10 : vector<16x128xf32>
    %c0_5 = arith.constant 0 : index
    %c0_6 = arith.constant 0 : index
    %12 = vector.load %arg4[%c0_5, %c0_6] : memref<16x128xf32, #tpu.memory_space<vmem>>, vector<16x128xf32>
    tpu.vector_store %arg4[%c0_5, %c0_6], %11 {strides = array<i32>} : memref<16x128xf32, #tpu.memory_space<vmem>>, vector<16x128xf32>,
    return
  }
  func.func @transform_0(%arg0: i32) -> (i32, i32) {
    %c0_i32 = arith.constant 0 : i32
    %c0_i32_0 = arith.constant 0 : i32
    return %arg0, %c0_i32 : i32, i32
  }
  func.func @transform_1(%arg0: i32) -> (i32, i32) {
    %c0_i32 = arith.constant 0 : i32
    %c0_i32_0 = arith.constant 0 : i32
    %c0_i32_1 = arith.constant 0 : i32
    return %c0_i32, %c0_i32_0 : i32, i32
  }
  func.func @transform_2(%arg0: i32) -> (i32, i32) {
    %c0_i32 = arith.constant 0 : i32
    %c0_i32_0 = arith.constant 0 : i32
    %c0_i32_1 = arith.constant 0 : i32
    return %c0_i32, %c0_i32_0 : i32, i32
  }
  func.func @transform_3(%arg0: i32) -> (i32, i32) {
    %c0_i32 = arith.constant 0 : i32
    %c0_i32_0 = arith.constant 0 : i32
    return %arg0, %c0_i32 : i32, i32
  }
}

</mosaic_0001>

<llo_original>
// kernel: tpu_custom_call.1
$region0: #{tpu_custom_call.1}
  #allocation0 [shape = 'u32[]', space=smem, size = 0x4, offset = 0x4, fixed_abs, tag = 'smem constant byte address 0x4 - core index']
  #allocation1 [shape = 'u32[144,128]{1,0:T(1,128)}', space=vmem, size = 0x12000, scoped, tag = 'internal scratch']
  %s0 = inlined_call_operand.vmem [shape: f32[16,1], index: 0, kind: input, shape index: {}]
  %s1 = inlined_call_operand.vmem [shape: f32[1,128], index: 1, kind: input, shape index: {}]
  %s2 = inlined_call_operand.vmem [shape: f32[1,128], index: 2, kind: input, shape index: {}]
  %s3 = inlined_call_operand.hbm [shape: f32[16,128], index: 3, kind: output, shape index: {}]
  %s4 = sld [smem:[#allocation0]]
  $region22: #{tpu_custom_call.1} parent=0
    _
  %s6 = ssub.s32 1, %s4
  %s7 = scalar_select 0, %s6, %s4
  $region1: #{tpu_custom_call.1} parent=0
    #allocation2 [shape = 'u8[8192]{0}', space=vmem, size = 0x2000, scoped, tag = 'output window, operand 0, single buffered']
    #allocation3 [shape = 's32[1]{0}', space=sflag, size = 0x4, scoped, tag = 'scoped memory for tpu_custom_call.1']
    %8 = vsyncpa [#allocation3], 0
    // Predicated region
    $region2: #{tpu_custom_call.1} parent=1 // pred_check
      _
    $region3: #{tpu_custom_call.1} parent=1 // pred_check_branch
      %10 = sbr.rel (0) target = $region5
    $region4: #{tpu_custom_call.1} parent=1 // pred_region
      _
    $region5: #{tpu_custom_call.1} parent=1 // pred_fallthru
      _
    // Predicated region
    $region6: #{tpu_custom_call.1} parent=1 // pred_check
      _
    $region7: #{tpu_custom_call.1} parent=1 // pred_check_branch
      %12 = sbr.rel (0) target = $region9
    $region8: #{tpu_custom_call.1} parent=1 // pred_region
      _
    $region9: #{tpu_custom_call.1} parent=1 // pred_fallthru
      _
    // Predicated region
    $region10: #{tpu_custom_call.1} parent=1 // pred_check
      _
    $region11: #{tpu_custom_call.1} parent=1 // pred_check_branch
      %14 = sbr.rel (0) target = $region13
    $region12: #{tpu_custom_call.1} parent=1 // pred_region
      _
    $region13: #{tpu_custom_call.1} parent=1 // pred_fallthru
      _
    %v15 = vld [vmem:[%s0] sm:$0xff]
    %v16 = vld [vmem:[%s0 + $0x8] sm:$0xff]
    %v17 = vld [vmem:[%s1] sm:$0x1]
    %19 = vset.pattern.permute.xlu0 0
    %20 = vperm.xlu0 %19, %v15
    %v21 = vpop.permute.xlu0 %20
    %24 = vset.pattern.permute.xlu0 0
    %25 = vperm.xlu0 %24, %v16
    %v26 = vpop.permute.xlu0 %25
    %v29 = vlaneseq
    %v30 = vshrl.u32 %v29, 7
    %v31 = vsub.s32 0, %v30
    %v32 = vrot.slane %v17, %v31
    %v34 = vmul.f32 %v21, %v32
    %v35 = vmul.f32 %v26, %v32
    %v36 = vld [vmem:[%s2] sm:$0x1]
    %v38 = vlaneseq
    %v39 = vshrl.u32 %v38, 7
    %v40 = vsub.s32 0, %v39
    %v41 = vrot.slane %v36, %v40
    %v43 = vadd.f32 %v34, %v41
    %v44 = vadd.f32 %v35, %v41
    %v45 = vmul.f32 %v43, %v43
    %v46 = vmul.f32 %v44, %v44
    %v47 = vsub.f32 0.0, %v45
    %v48 = vsub.f32 0.0, %v46
    %v49 = vmul.f32 %v47, 1.442695
    %v50 = vpow.pop %v49
    %v51 = vmul.f32 %v48, 1.442695
    %v52 = vpow.pop %v51
    %53 = vst [vmem:[#allocation2] sm:$0xff] %v50
    %54 = vst [vmem:[#allocation2 + $0x8] sm:$0xff] %v52
    // Predicated region
    $region14: #{tpu_custom_call.1} parent=1 // pred_check
      _
    $region15: #{tpu_custom_call.1} parent=1 // pred_check_branch
      %56 = sbr.rel (0) target = $region17
    $region16: #{tpu_custom_call.1} parent=1 // pred_region
      %s58 = ssub.s32 256, 256
      %59 = vsyncadd [#allocation3], %s58
      %s60 = sshll.u32 [#allocation2], 4
      %s61 = int_to_ptr.vmem [resolvable:$true] %s60
      %66 = dma.vmem_to_hbm [thread:$0]  %s61, 256, %s3, [#allocation3], 128, 128, 8
    $region17: #{tpu_custom_call.1} parent=1 // pred_fallthru
      _
    // Predicated region
    $region18: #{tpu_custom_call.1} parent=1 // pred_check
      _
    $region19: #{tpu_custom_call.1} parent=1 // pred_check_branch
      %68 = sbr.rel (0) target = $region21
    $region20: #{tpu_custom_call.1} parent=1 // pred_region
      %69 = dma.done [#allocation3], 256
    $region21: #{tpu_custom_call.1} parent=1 // pred_fallthru
      _
    %70 = vsyncpa [#allocation3], 1

</llo_original>
